<compile_context>
chip_gen: v5e
topology: v5e:2x2
jax: 0.10.0
libtpu: 0.0.40
codegen_flags: <defaults>
</compile_context>

<pallas_src>
import functools

import jax
import jax.numpy as jnp
from jax import lax
from jax.experimental import pallas as pl
from jax.experimental.pallas import tpu as pltpu


def _round_up(x, m):
    return (x + m - 1) // m * m


def _vmem_capacity_bytes():
    """Generation-aware VMEM capacity; falls back to v7x's 64 MiB / TC."""
    try:
        info = pltpu.get_tpu_info()
        cap = int(getattr(info, "vmem_capacity_bytes", 0) or 0)
        if cap > 0:
            return cap
    except Exception:
        pass
    return 64 << 20


def _kernel_vmem_cap(capacity=None):
    """Scoped-VMEM cap for kernels: ~56 MiB on v7x, ~112 MiB on v5e/v6e."""
    if capacity is None:
        capacity = _vmem_capacity_bytes()
    return int(min(capacity - (8 << 20), capacity * 7 // 8))


# --------------------------------------------------------------------------
# Path 1: VMEM-resident table, one-hot gather on the MXU (vocab chunked).
# --------------------------------------------------------------------------
def _onehot_embed_kernel(vocab, vchunk, ids_ref, w_ref, out_ref, acc_ref):
    # ids_ref: VMEM (1, tok_block, 1) int32 -- this tile's token ids (column)
    # w_ref  : VMEM (vocab_pad, hidden)     -- full table, resident (1 buffer)
    # out_ref: VMEM (tok_block, hidden)
    # acc_ref: VMEM (tok_block, hidden) f32 -- K-chunk accumulator
    ids = jnp.clip(ids_ref[0], 0, vocab - 1)          # (tok_block, 1)
    tok_block = out_ref.shape[0]
    n_chunks = w_ref.shape[0] // vchunk

    acc_ref[...] = jnp.zeros_like(acc_ref)

    @pl.loop(0, n_chunks)
    def _(k):
        off = pl.multiple_of(k * vchunk, vchunk)
        w_chunk = w_ref[pl.ds(off, vchunk), :]
        iota = lax.broadcasted_iota(jnp.int32, (tok_block, vchunk), 1) + off
        one_hot = (iota == ids).astype(w_chunk.dtype)
        acc_ref[...] += jnp.dot(one_hot, w_chunk,
                                preferred_element_type=jnp.float32)

    out_ref[...] = acc_ref[...].astype(out_ref.dtype)


def _embed_small_table(flat_ids, weight, tok_block=None, vchunk=None,
                       vmem_cap=None):
    n_tok = flat_ids.shape[0]
    vocab, hidden = weight.shape
    itemsize = weight.dtype.itemsize
    if vmem_cap is None:
        vmem_cap = _kernel_vmem_cap()

    # K-chunk width: keeps the one-hot intermediate ~tok_block*vchunk*4 bytes
    # instead of shrinking tok_block (the MXU wants M >= 256).
    if vchunk is None:
        vchunk = min(512, _round_up(vocab, 128))
    vchunk = max(128, _round_up(vchunk, 128))
    vocab_pad = _round_up(vocab, vchunk)
    if vocab_pad != vocab:
        weight = jnp.pad(weight, ((0, vocab_pad - vocab), (0, 0)))
    table_bytes = vocab_pad * hidden * itemsize

    if tok_block is None:
        tok_block = min(512, _round_up(n_tok, 8))
    tok_block = max(8, _round_up(tok_block, 8))

    def vmem_need(tb, table_bufs):
        return (table_bufs * table_bytes           # resident table
                + 2 * tb * hidden * itemsize       # double-buffered out tiles
                + tb * hidden * 4                  # f32 accumulator scratch
                + tb * vchunk * 4                  # one-hot chunk
                + 4 * tb * 4                       # id tiles
                + (2 << 20))                       # slack

    while tok_block > 8 and vmem_need(tok_block, 1) > vmem_cap:
        tok_block //= 2
    tok_block = max(8, _round_up(tok_block, 8))

    n_pad = _round_up(n_tok, tok_block)
    if n_pad != n_tok:
        flat_ids = jnp.pad(flat_ids, (0, n_pad - n_tok))  # sliced off later
    num_tiles = n_pad // tok_block
    ids3 = flat_ids.reshape(num_tiles, tok_block, 1)

    kernel = functools.partial(_onehot_embed_kernel, vocab, vchunk)

    def call(single_buffer_table):
        if single_buffer_table:
            # Constant index_map -> fetched once; 1 buffer halves the table's
            # VMEM footprint (frees room for larger tables / tok_block).
            w_spec = pl.BlockSpec((vocab_pad, hidden), lambda i: (0, 0),
                                  pipeline_mode=pl.Buffered(1))
        else:
            w_spec = pl.BlockSpec((vocab_pad, hidden), lambda i: (0, 0))
        bufs = 1 if single_buffer_table else 2
        vmem_limit = int(min(max(vmem_need(tok_block, bufs), 8 << 20), vmem_cap))
        return pl.pallas_call(
            kernel,
            out_shape=jax.ShapeDtypeStruct((n_pad, hidden), weight.dtype),
            grid=(num_tiles,),
            in_specs=[pl.BlockSpec((1, tok_block, 1), lambda i: (i, 0, 0)),
                      w_spec],
            out_specs=pl.BlockSpec((tok_block, hidden), lambda i: (i, 0)),
            scratch_shapes=[pltpu.VMEM((tok_block, hidden), jnp.float32)],
            compiler_params=pltpu.CompilerParams(
                dimension_semantics=("parallel",),   # stateless -> megacore-safe
                vmem_limit_bytes=vmem_limit,
            ),
        )(ids3, weight)

    try:
        return call(True)
    except Exception:          # compat fallback if Buffered(1) is unsupported
        return call(False)


# --------------------------------------------------------------------------
# Path 2: HBM table, manual row-gather DMAs with cross-step prefetch.
# --------------------------------------------------------------------------
def _gather_embed_kernel(tok_block, vocab, drain_with_dma,
                         ids_ref, w_hbm, out_ref, buf, sem):
    # ids_ref: SMEM [n_pad] int32           (scalar-prefetched token ids)
    # w_hbm  : HBM  [vocab, hidden]         (raw ref, manual row DMAs)
    # out_ref: VMEM [tok_block, hidden]     (current output tile)
    # buf    : VMEM [2, tok_block, hidden]  (double-buffered gather scratch)
    # sem    : DMA semaphores, one shared per slot
    i = pl.program_id(1)                     # inner ("arbitrary") axis
    n_inner = pl.num_programs(1)
    tile = pl.program_id(0) * n_inner + i    # global tile owned by this core
    slot = i & 1

    def issue(tile_idx, s):
        base = tile_idx * tok_block

        def body(r, carry):
            tid = jnp.clip(ids_ref[base + r], 0, vocab - 1)  # guard OOB DMA
            pltpu.make_async_copy(w_hbm.at[tid], buf.at[s, r], sem.at[s]).start()
            return carry

        lax.fori_loop(0, tok_block, body, 0, unroll=8)

    @pl.when(i == 0)
    def _():
        issue(tile, slot)                    # prime this core's first tile

    @pl.when(i + 1 < n_inner)
    def _():
        issue(tile + 1, 1 - slot)            # prefetch next tile, other slot

    # Single tile-sized wait: DMA semaphores count bytes, so one descriptor
    # covering the full slot (tok_block*hidden*itemsize bytes) accounts for
    # all tok_block row copies -- no per-row descriptor/wait issue cost.
    pltpu.make_async_copy(w_hbm.at[0:tok_block], buf.at[slot],
                          sem.at[slot]).wait()

    if drain_with_dma:
        # Drain via local DMA instead of burning vld/vst slots.
        pltpu.sync_copy(buf.at[slot], out_ref)
    else:
        out_ref[...] = buf[slot]


_MAX_GATHER_TOKENS = 32768   # caps the scalar-prefetch SMEM footprint (~128 KiB)


def _embed_hbm_gather_one(flat_ids, weight, tok_block, vmem_cap):
    n_tok = flat_ids.shape[0]
    vocab, hidden = weight.shape
    itemsize = weight.dtype.itemsize

    if tok_block is None:
        tok_block = 256
    tok_block = min(tok_block, max(8, _round_up(n_tok, 8)))
    tok_block = max(8, _round_up(tok_block, 8))

    def vmem_need(tb):
        # 2-slot gather scratch + double-buffered output tiles + slack.
        return 4 * tb * hidden * itemsize + (2 << 20)

    while tok_block > 8 and vmem_need(tok_block) > vmem_cap:
        tok_block //= 2
    tok_block = max(8, _round_up(tok_block, 8))
    if vocab >= 8:
        tok_block = min(tok_block, (vocab // 8) * 8)  # wait-descriptor src slice

    num_tiles = -(-n_tok // tok_block)
    n_cores = 2 if num_tiles >= 4 else 1     # megacore-parallel outer axis (v7x)
    num_tiles = _round_up(num_tiles, n_cores)
    inner = num_tiles // n_cores
    n_pad = num_tiles * tok_block
    if n_pad != n_tok:
        flat_ids = jnp.pad(flat_ids, (0, n_pad - n_tok))

    vmem_limit = int(min(max(vmem_need(tok_block), 8 << 20), vmem_cap))

    def call(drain_with_dma):
        kernel = functools.partial(_gather_embed_kernel, tok_block, vocab,
                                   drain_with_dma)
        return pl.pallas_call(
            kernel,
            out_shape=jax.ShapeDtypeStruct((n_pad, hidden), weight.dtype),
            grid_spec=pltpu.PrefetchScalarGridSpec(
                num_scalar_prefetch=1,
                grid=(n_cores, inner),
                in_specs=[pl.BlockSpec(memory_space=pl.ANY)],  # table stays in HBM
                out_specs=pl.BlockSpec((tok_block, hidden),
                                       lambda c, i, ids: (c * inner + i, 0)),
                scratch_shapes=[
                    pltpu.VMEM((2, tok_block, hidden), weight.dtype),
                    pltpu.SemaphoreType.DMA((2,)),
                ],
            ),
            compiler_params=pltpu.CompilerParams(
                # Outer axis is independent per core; inner axis carries the
                # cross-step prefetch state so it stays "arbitrary".
                dimension_semantics=("parallel", "arbitrary"),
                vmem_limit_bytes=vmem_limit,
            ),
        )(flat_ids, weight)

    try:
        out = call(True)
    except Exception:          # compat fallback: drain via vector store
        out = call(False)
    return out[:n_tok]


def _embed_hbm_gather(flat_ids, weight, tok_block=None, vmem_cap=None):
    if vmem_cap is None:
        vmem_cap = _kernel_vmem_cap()
    n_tok = flat_ids.shape[0]
    if n_tok <= _MAX_GATHER_TOKENS:
        return _embed_hbm_gather_one(flat_ids, weight, tok_block, vmem_cap)
    # Chunk long sequences so the scalar-prefetched id array stays SMEM-sized.
    outs = [
        _embed_hbm_gather_one(flat_ids[s:s + _MAX_GATHER_TOKENS], weight,
                              tok_block, vmem_cap)
        for s in range(0, n_tok, _MAX_GATHER_TOKENS)
    ]
    return jnp.concatenate(outs, axis=0)


# --------------------------------------------------------------------------
# Public wrapper.
# --------------------------------------------------------------------------
def vocab_parallel_embedding(input_ids, weight, *, fast_table_bytes=None,
                             tok_block=None, vchunk=None):
    """Pallas equivalent of VocabParallelEmbedding.forward: out = weight[ids]."""
    orig_shape = input_ids.shape
    flat_ids = input_ids.reshape(-1).astype(jnp.int32)
    n_tok = flat_ids.shape[0]
    vocab, hidden = weight.shape
    table_bytes = vocab * hidden * weight.dtype.itemsize

    capacity = _vmem_capacity_bytes()
    vmem_cap = _kernel_vmem_cap(capacity)
    if fast_table_bytes is None:
        # Generation-aware dispatch: anything that fits the resident-table
        # working set takes the zero-DMA MXU path (per-row HBM gathers of a
        # few hundred bytes are descriptor-bound, so "fits in VMEM" is the
        # right test, not table size alone).  ~32 MiB on v7x, ~64 MiB v5e/v6e.
        fast_table_bytes = capacity // 2

    if table_bytes <= fast_table_bytes:
        out = _embed_small_table(flat_ids, weight, tok_block=tok_block,
                                 vchunk=vchunk, vmem_cap=vmem_cap)
    else:
        # TODO(synk): on v5e, f32 tables near the threshold may still prefer
        # the gather path (f32 MXU rate); override via fast_table_bytes.
        out = _embed_hbm_gather(flat_ids, weight, tok_block=tok_block,
                                vmem_cap=vmem_cap)

    return out[:n_tok].reshape(*orig_shape, hidden)


def make_embedding_weight(key, vocab_size, hidden_size, padding_idx=None):
    """Deterministic nn.Embedding-style init: N(0,1), padding_idx row zeroed."""
    w = jax.random.normal(key, (vocab_size, hidden_size), dtype=jnp.float32)
    if padding_idx is not None:
        w = w.at[padding_idx].set(0.0)
    return w


if __name__ == "__main__":
    # Small config consistent with the module:
    #   config.vocab_size=256, config.hidden_size=128, padding_idx=0
    vocab_size = 256
    hidden_size = 128
    padding_idx = 0
    batch, seq = 2, 8

    key = jax.random.PRNGKey(0)
    k_w, k_ids, k_ids2 = jax.random.split(key, 3)

    weight = make_embedding_weight(k_w, vocab_size, hidden_size, padding_idx)
    input_ids = jax.random.randint(k_ids, (batch, seq), 0, vocab_size,
                                   dtype=jnp.int32)
    # Force a couple of padding tokens to exercise the zeroed row.
    input_ids = input_ids.at[0, 0].set(padding_idx)
    input_ids = input_ids.at[1, 3].set(padding_idx)

    # Reference: plain gather (what nn.Embedding.forward computes).
    ref = jnp.take(weight, input_ids, axis=0)

    # 1. Fast path (default): 128 KiB table is VMEM-resident, one-hot @ W.
    out_fast = jax.block_until_ready(vocab_parallel_embedding(input_ids, weight))
    assert out_fast.shape == (batch, seq, hidden_size), out_fast.shape
    assert out_fast.dtype == weight.dtype, out_fast.dtype
    assert jnp.allclose(out_fast, ref), "fast-path mismatch vs reference lookup"

    # 2. Fast path with the in-kernel vocab chunking exercised (2 K-chunks).
    out_chunk = jax.block_until_ready(
        vocab_parallel_embedding(input_ids, weight, vchunk=128, tok_block=8))
    assert jnp.allclose(out_chunk, ref), "chunked fast-path mismatch"

    # 3. Gather path (forced): HBM row gather, double-buffered prefetch,
    #    single tile-sized wait; grid=(1, 2) exercises the cross-step prefetch.
    out_gather = jax.block_until_ready(
        vocab_parallel_embedding(input_ids, weight, fast_table_bytes=0,
                                 tok_block=8))
    assert out_gather.shape == (batch, seq, hidden_size), out_gather.shape
    assert jnp.allclose(out_gather, ref), "gather-path mismatch vs reference"

    # 4. Gather path with enough tiles for the megacore-parallel outer axis
    #    (5 tiles padded to 6 -> grid=(2, 3)).
    long_ids = jax.random.randint(k_ids2, (40,), 0, vocab_size, dtype=jnp.int32)
    ref_long = jnp.take(weight, long_ids, axis=0)
    out_long = jax.block_until_ready(
        vocab_parallel_embedding(long_ids, weight, fast_table_bytes=0,
                                 tok_block=8))
    assert out_long.shape == (40, hidden_size), out_long.shape
    assert jnp.allclose(out_long, ref_long), "megacore gather-path mismatch"

    print("KERNEL_OK")
</pallas_src>

<mosaic_0001>
module attributes {stable_mosaic.version = 11 : i64} {
  func.func @_onehot_embed_kernel(%arg0: i32, %arg1: memref<1x16x1xi32, #tpu.memory_space<vmem>>, %arg2: memref<256x128xf32, #tpu.memory_space<vmem>>, %arg3: memref<16x128xf32, #tpu.memory_space<vmem>>, %arg4: memref<16x128xf32, #tpu.memory_space<vmem>>) attributes {dimension_semantics = [#tpu.dimension_semantics<parallel>], iteration_bounds = array<i64: 1>, scalar_prefetch = 0 : i64, scratch_operands = 1 : i64, tpu.core_type = #tpu.core_type<tc>, window_params = [{transform_indices = @transform_0, window_bounds = array<i64: 1, 16, 1>}, {pipeline_mode = #tpu.pipeline_mode<synchronous>, transform_indices = @transform_1, window_bounds = array<i64: 256, 128>}, {transform_indices = @transform_2, window_bounds = array<i64: 16, 128>}]} {
    %c0 = arith.constant 0 : index
    %c0_0 = arith.constant 0 : index
    %c0_1 = arith.constant 0 : index
    %0 = vector.load %arg1[%c0, %c0_0, %c0_1] : memref<1x16x1xi32, #tpu.memory_space<vmem>>, vector<1x16x1xi32>
    %1 = vector.shape_cast %0 : vector<1x16x1xi32> to vector<16x1xi32>
    %c0_i32 = arith.constant 0 : i32
    %c255_i32 = arith.constant 255 : i32
    %2 = vector.broadcast %c0_i32 : i32 to vector<16x1xi32>
    %3 = arith.maxsi %2, %1 : vector<16x1xi32>
    %4 = vector.broadcast %c255_i32 : i32 to vector<16x1xi32>
    %5 = arith.minsi %4, %3 : vector<16x1xi32>
    %cst = arith.constant 0.000000e+00 : f32
    %6 = vector.broadcast %cst : f32 to vector<16x128xf32>
    %c0_2 = arith.constant 0 : index
    %c0_3 = arith.constant 0 : index
    %7 = vector.load %arg4[%c0_2, %c0_3] : memref<16x128xf32, #tpu.memory_space<vmem>>, vector<16x128xf32>
    tpu.vector_store %arg4[%c0_2, %c0_3], %6 {strides = array<i32>} : memref<16x128xf32, #tpu.memory_space<vmem>>, vector<16x128xf32>,
    %c0_i32_4 = arith.constant 0 : i32
    %c1_i32 = arith.constant 1 : i32
    %8 = arith.muli %c0_i32_4, %c1_i32 : i32
    %c0_i32_5 = arith.constant 0 : i32
    %9 = arith.addi %c0_i32_5, %8 : i32
    %c256_i32 = arith.constant 256 : i32
    %10 = arith.muli %9, %c256_i32 : i32
    %11 = tpu.assume_multiple %10, 256 : i32
    %12 = arith.index_cast %11 : i32 to index
    %c0_6 = arith.constant 0 : index
    %13 = vector.load %arg2[%12, %c0_6] : memref<256x128xf32, #tpu.memory_space<vmem>>, vector<256x128xf32>
    %14 = tpu.iota {dimensions = array<i32: 1>} : vector<16x256xi32>
    %15 = vector.broadcast %11 : i32 to vector<16x256xi32>
    %16 = arith.addi %14, %15 : vector<16x256xi32>
    %17 = vector.broadcast %5 : vector<16x1xi32> to vector<16x256xi32>
    %18 = arith.cmpi eq, %16, %17 : vector<16x256xi32>
    %19 = arith.extui %18 : vector<16x256xi1> to vector<16x256xi32>
    %20 = arith.sitofp %19 : vector<16x256xi32> to vector<16x256xf32>
    %c0_7 = arith.constant 0 : index
    %c0_8 = arith.constant 0 : index
    %21 = vector.load %arg4[%c0_7, %c0_8] : memref<16x128xf32, #tpu.memory_space<vmem>>, vector<16x128xf32>
    %cst_9 = arith.constant dense<0.000000e+00> : vector<16x128xf32>
    %22 = tpu.matmul %20, %13, %cst_9 {dimension_numbers = #tpu.dot_dimension_numbers<[1], [0], [0], [1], [0, 0, 1, 1], [], []>} : vector<16x256xf32>, vector<256x128xf32>, vector<16x128xf32> -> vector<16x128xf32>
    %23 = arith.addf %21, %22 : vector<16x128xf32>
    %c0_10 = arith.constant 0 : index
    %c0_11 = arith.constant 0 : index
    %24 = vector.load %arg4[%c0_10, %c0_11] : memref<16x128xf32, #tpu.memory_space<vmem>>, vector<16x128xf32>
    tpu.vector_store %arg4[%c0_10, %c0_11], %23 {strides = array<i32>} : memref<16x128xf32, #tpu.memory_space<vmem>>, vector<16x128xf32>,
    %c1_i32_12 = arith.constant 1 : i32
    %c0_13 = arith.constant 0 : index
    %c0_14 = arith.constant 0 : index
    %25 = vector.load %arg4[%c0_13, %c0_14] : memref<16x128xf32, #tpu.memory_space<vmem>>, vector<16x128xf32>
    %c0_15 = arith.constant 0 : index
    %c0_16 = arith.constant 0 : index
    %26 = vector.load %arg3[%c0_15, %c0_16] : memref<16x128xf32, #tpu.memory_space<vmem>>, vector<16x128xf32>
    tpu.vector_store %arg3[%c0_15, %c0_16], %25 {strides = array<i32>} : memref<16x128xf32, #tpu.memory_space<vmem>>, vector<16x128xf32>,
    return
  }
  func.func @transform_0(%arg0: i32) -> (i32, i32, i32) {
    %c0_i32 = arith.constant 0 : i32
    %c0_i32_0 = arith.constant 0 : i32
    %c0_i32_1 = arith.constant 0 : i32
    return %arg0, %c0_i32, %c0_i32_0 : i32, i32, i32
  }
  func.func @transform_1(%arg0: i32) -> (i32, i32) {
    %c0_i32 = arith.constant 0 : i32
    %c0_i32_0 = arith.constant 0 : i32
    %c0_i32_1 = arith.constant 0 : i32
    return %c0_i32, %c0_i32_0 : i32, i32
  }
  func.func @transform_2(%arg0: i32) -> (i32, i32) {
    %c0_i32 = arith.constant 0 : i32
    %c0_i32_0 = arith.constant 0 : i32
    return %arg0, %c0_i32 : i32, i32
  }
}

module attributes {stable_mosaic.version = 11 : i64} {
  func.func @_onehot_embed_kernel(%arg0: i32, %arg1: memref<1x16x1xi32, #tpu.memory_space<vmem>>, %arg2: memref<256x128xf32, #tpu.memory_space<vmem>>, %arg3: memref<16x128xf32, #tpu.memory_space<vmem>>, %arg4: memref<16x128xf32, #tpu.memory_space<vmem>>) attributes {dimension_semantics = [#tpu.dimension_semantics<parallel>], iteration_bounds = array<i64: 1>, scalar_prefetch = 0 : i64, scratch_operands = 1 : i64, tpu.core_type = #tpu.core_type<tc>, window_params = [{transform_indices = @transform_0, window_bounds = array<i64: 1, 16, 1>}, {pipeline_mode = #tpu.pipeline_mode<synchronous>, transform_indices = @transform_1, window_bounds = array<i64: 256, 128>}, {transform_indices = @transform_2, window_bounds = array<i64: 16, 128>}]} {
    %c0 = arith.constant 0 : index
    %c0_0 = arith.constant 0 : index
    %c0_1 = arith.constant 0 : index
    %0 = vector.load %arg1[%c0, %c0_0, %c0_1] : memref<1x16x1xi32, #tpu.memory_space<vmem>>, vector<1x16x1xi32>
    %1 = vector.shape_cast %0 : vector<1x16x1xi32> to vector<16x1xi32>
    %c0_i32 = arith.constant 0 : i32
    %c255_i32 = arith.constant 255 : i32
    %2 = vector.broadcast %c0_i32 : i32 to vector<16x1xi32>
    %3 = arith.maxsi %2, %1 : vector<16x1xi32>
    %4 = vector.broadcast %c255_i32 : i32 to vector<16x1xi32>
    %5 = arith.minsi %4, %3 : vector<16x1xi32>
    %cst = arith.constant 0.000000e+00 : f32
    %6 = vector.broadcast %cst : f32 to vector<16x128xf32>
    %c0_2 = arith.constant 0 : index
    %c0_3 = arith.constant 0 : index
    %7 = vector.load %arg4[%c0_2, %c0_3] : memref<16x128xf32, #tpu.memory_space<vmem>>, vector<16x128xf32>
    tpu.vector_store %arg4[%c0_2, %c0_3], %6 {strides = array<i32>} : memref<16x128xf32, #tpu.memory_space<vmem>>, vector<16x128xf32>,
    %c0_i32_4 = arith.constant 0 : i32
    %c1_i32 = arith.constant 1 : i32
    %8 = arith.muli %c0_i32_4, %c1_i32 : i32
    %c0_i32_5 = arith.constant 0 : i32
    %9 = arith.addi %c0_i32_5, %8 : i32
    %c256_i32 = arith.constant 256 : i32
    %10 = arith.muli %9, %c256_i32 : i32
    %11 = tpu.assume_multiple %10, 256 : i32
    %12 = arith.index_cast %11 : i32 to index
    %c0_6 = arith.constant 0 : index
    %13 = vector.load %arg2[%12, %c0_6] : memref<256x128xf32, #tpu.memory_space<vmem>>, vector<256x128xf32>
    %14 = tpu.iota {dimensions = array<i32: 1>} : vector<16x256xi32>
    %15 = vector.broadcast %11 : i32 to vector<16x256xi32>
    %16 = arith.addi %14, %15 : vector<16x256xi32>
    %17 = vector.broadcast %5 : vector<16x1xi32> to vector<16x256xi32>
    %18 = arith.cmpi eq, %16, %17 : vector<16x256xi32>
    %19 = arith.extui %18 : vector<16x256xi1> to vector<16x256xi32>
    %20 = arith.sitofp %19 : vector<16x256xi32> to vector<16x256xf32>
    %c0_7 = arith.constant 0 : index
    %c0_8 = arith.constant 0 : index
    %21 = vector.load %arg4[%c0_7, %c0_8] : memref<16x128xf32, #tpu.memory_space<vmem>>, vector<16x128xf32>
    %cst_9 = arith.constant dense<0.000000e+00> : vector<16x128xf32>
    %22 = tpu.matmul %20, %13, %cst_9 {dimension_numbers = #tpu.dot_dimension_numbers<[1], [0], [0], [1], [0, 0, 1, 1], [], []>} : vector<16x256xf32>, vector<256x128xf32>, vector<16x128xf32> -> vector<16x128xf32>
    %23 = arith.addf %21, %22 : vector<16x128xf32>
    %c0_10 = arith.constant 0 : index
    %c0_11 = arith.constant 0 : index
    %24 = vector.load %arg4[%c0_10, %c0_11] : memref<16x128xf32, #tpu.memory_space<vmem>>, vector<16x128xf32>
    tpu.vector_store %arg4[%c0_10, %c0_11], %23 {strides = array<i32>} : memref<16x128xf32, #tpu.memory_space<vmem>>, vector<16x128xf32>,
    %c1_i32_12 = arith.constant 1 : i32
    %c0_13 = arith.constant 0 : index
    %c0_14 = arith.constant 0 : index
    %25 = vector.load %arg4[%c0_13, %c0_14] : memref<16x128xf32, #tpu.memory_space<vmem>>, vector<16x128xf32>
    %c0_15 = arith.constant 0 : index
    %c0_16 = arith.constant 0 : index
    %26 = vector.load %arg3[%c0_15, %c0_16] : memref<16x128xf32, #tpu.memory_space<vmem>>, vector<16x128xf32>
    tpu.vector_store %arg3[%c0_15, %c0_16], %25 {strides = array<i32>} : memref<16x128xf32, #tpu.memory_space<vmem>>, vector<16x128xf32>,
    return
  }
  func.func @transform_0(%arg0: i32) -> (i32, i32, i32) {
    %c0_i32 = arith.constant 0 : i32
    %c0_i32_0 = arith.constant 0 : i32
    %c0_i32_1 = arith.constant 0 : i32
    return %arg0, %c0_i32, %c0_i32_0 : i32, i32, i32
  }
  func.func @transform_1(%arg0: i32) -> (i32, i32) {
    %c0_i32 = arith.constant 0 : i32
    %c0_i32_0 = arith.constant 0 : i32
    %c0_i32_1 = arith.constant 0 : i32
    return %c0_i32, %c0_i32_0 : i32, i32
  }
  func.func @transform_2(%arg0: i32) -> (i32, i32) {
    %c0_i32 = arith.constant 0 : i32
    %c0_i32_0 = arith.constant 0 : i32
    return %arg0, %c0_i32 : i32, i32
  }
}

</mosaic_0001>

<llo_original>
// kernel: tpu_custom_call.1
$region0: #{tpu_custom_call.1}
  #allocation0 [shape = 'u32[]', space=smem, size = 0x4, offset = 0x4, fixed_abs, tag = 'smem constant byte address 0x4 - core index']
  #allocation1 [shape = 'u32[72,128]{1,0:T(1,128)}', space=vmem, size = 0x9000, scoped, tag = 'internal scratch']
  #allocation2 [shape = 'f32[16,128]{1,0:T(8,128)}', space=vmem, size = 0x2000, scoped, tag = 'scratch operand']
  %s0 = inlined_call_operand.vmem [shape: s32[1,16,1], index: 0, kind: input, shape index: {}]
  %s1 = inlined_call_operand.hbm [shape: f32[256,128], index: 1, kind: input, shape index: {}]
  %s2 = inlined_call_operand.hbm [shape: f32[16,128], index: 2, kind: output, shape index: {}]
  %s3 = sld [smem:[#allocation0]]
  $region22: #{tpu_custom_call.1} parent=0
    _
  %s5 = ssub.s32 1, %s3
  %s6 = scalar_select 0, %s5, %s3
  $region1: #{tpu_custom_call.1} parent=0
    #allocation3 [shape = 'u8[131072]{0}', space=vmem, size = 0x20000, scoped, tag = 'input window, operand 1, single buffered']
    #allocation4 [shape = 's32[1]{0}', space=sflag, size = 0x4, scoped, tag = 'scoped memory for tpu_custom_call.1']
    #allocation5 [shape = 's32[1]{0}', space=sflag, size = 0x4, scoped, tag = 'scoped memory for tpu_custom_call.1']
    #allocation6 [shape = 'u8[8192]{0}', space=vmem, size = 0x2000, scoped, tag = 'output window, operand 0, single buffered']
    %7 = vsyncpa [#allocation4], 0
    %8 = vsyncpa [#allocation5], 0
    // Predicated region
    $region2: #{tpu_custom_call.1} parent=1 // pred_check
      _
    $region3: #{tpu_custom_call.1} parent=1 // pred_check_branch
      %10 = sbr.rel (0) target = $region5
    $region4: #{tpu_custom_call.1} parent=1 // pred_region
      _
    $region5: #{tpu_custom_call.1} parent=1 // pred_fallthru
      _
    // Predicated region
    $region6: #{tpu_custom_call.1} parent=1 // pred_check
      _
    $region7: #{tpu_custom_call.1} parent=1 // pred_check_branch
      %12 = sbr.rel (0) target = $region9
    $region8: #{tpu_custom_call.1} parent=1 // pred_region
      %14 = vsyncadd [#allocation4], 0
      %s15 = sshll.u32 %s1, 4
      %s16 = int_to_ptr.hbm [resolvable:$true] %s15
      %s17 = sshll.u32 [#allocation3], 4
      %s18 = int_to_ptr.vmem [resolvable:$true] %s17
      %23 = dma.hbm_to_vmem [thread:$0]  %s16, 4096, %s18, [#allocation4], 128, 128, 8
    $region9: #{tpu_custom_call.1} parent=1 // pred_fallthru
      _
    // Predicated region
    $region10: #{tpu_custom_call.1} parent=1 // pred_check
      _
    $region11: #{tpu_custom_call.1} parent=1 // pred_check_branch
      %25 = sbr.rel (0) target = $region13
    $region12: #{tpu_custom_call.1} parent=1 // pred_region
      %27 = dma.done [#allocation4], 4096
    $region13: #{tpu_custom_call.1} parent=1 // pred_fallthru
      _
    %v28 = vld [vmem:[%s0] sm:$0xff]
    %v29 = vld [vmem:[%s0 + $0x8] sm:$0xff]
    %vm30 = vcmp.gt.s32.totalorder %v28, 0
    %v31 = vsel %vm30, %v28, 0
    %vm32 = vcmp.gt.s32.totalorder %v29, 0
    %v33 = vsel %vm32, %v29, 0
    %vm34 = vcmp.lt.s32.totalorder %v31, 255
    %v35 = vsel %vm34, %v31, 255
    %vm36 = vcmp.lt.s32.totalorder %v33, 255
    %v37 = vsel %vm36, %v33, 255
    %38 = vst [vmem:[#allocation2] sm:$0xff] 0.0
    %39 = vst [vmem:[#allocation2 + $0x8] sm:$0xff] 0.0
    %v40 = vld [vmem:[#allocation3] sm:$0xff]
    %v41 = vld [vmem:[#allocation3 + $0x8] sm:$0xff]
    %v42 = vld [vmem:[#allocation3 + $0x10] sm:$0xff]
    %v43 = vld [vmem:[#allocation3 + $0x18] sm:$0xff]
    %v44 = vld [vmem:[#allocation3 + $0x20] sm:$0xff]
    %v45 = vld [vmem:[#allocation3 + $0x28] sm:$0xff]
    %v46 = vld [vmem:[#allocation3 + $0x30] sm:$0xff]
    %v47 = vld [vmem:[#allocation3 + $0x38] sm:$0xff]
    %v48 = vld [vmem:[#allocation3 + $0x40] sm:$0xff]
    %v49 = vld [vmem:[#allocation3 + $0x48] sm:$0xff]
    %v50 = vld [vmem:[#allocation3 + $0x50] sm:$0xff]
    %v51 = vld [vmem:[#allocation3 + $0x58] sm:$0xff]
    %v52 = vld [vmem:[#allocation3 + $0x60] sm:$0xff]
    %v53 = vld [vmem:[#allocation3 + $0x68] sm:$0xff]
    %v54 = vld [vmem:[#allocation3 + $0x70] sm:$0xff]
    %v55 = vld [vmem:[#allocation3 + $0x78] sm:$0xff]
    %v56 = vld [vmem:[#allocation3 + $0x80] sm:$0xff]
    %v57 = vld [vmem:[#allocation3 + $0x88] sm:$0xff]
    %v58 = vld [vmem:[#allocation3 + $0x90] sm:$0xff]
    %v59 = vld [vmem:[#allocation3 + $0x98] sm:$0xff]
    %v60 = vld [vmem:[#allocation3 + $0xa0] sm:$0xff]
    %v61 = vld [vmem:[#allocation3 + $0xa8] sm:$0xff]
    %v62 = vld [vmem:[#allocation3 + $0xb0] sm:$0xff]
    %v63 = vld [vmem:[#allocation3 + $0xb8] sm:$0xff]
    %v64 = vld [vmem:[#allocation3 + $0xc0] sm:$0xff]
    %v65 = vld [vmem:[#allocation3 + $0xc8] sm:$0xff]
    %v66 = vld [vmem:[#allocation3 + $0xd0] sm:$0xff]
    %v67 = vld [vmem:[#allocation3 + $0xd8] sm:$0xff]
    %v68 = vld [vmem:[#allocation3 + $0xe0] sm:$0xff]
    %v69 = vld [vmem:[#allocation3 + $0xe8] sm:$0xff]
    %v70 = vld [vmem:[#allocation3 + $0xf0] sm:$0xff]
    %v71 = vld [vmem:[#allocation3 + $0xf8] sm:$0xff]
    %v72 = vlaneseq
    %v73 = vand.u32 %v72, 127
    %v74 = vadd.s32 %v73, 128
    %v75 = vstv 0
    %v76 = vadd.s32 %v73, %v75
    %v77 = vadd.s32 %v74, %v75
    %78 = vset.pattern.permute.xlu0 0
    %79 = vperm.xlu0 %78, %v35
    %v80 = vpop.permute.xlu0 %79
    %81 = vset.pattern.permute.xlu0 0
    %82 = vperm.xlu0 %81, %v37
    %v83 = vpop.permute.xlu0 %82
    %vm84 = vcmp.eq.s32.totalorder %v76, %v80
    %vm85 = vcmp.eq.s32.totalorder %v77, %v80
    %vm86 = vcmp.eq.s32.totalorder %v76, %v83
    %vm87 = vcmp.eq.s32.totalorder %v77, %v83
    %v88 = vsel %vm84, 1, 0
    %v89 = vsel %vm85, 1, 0
    %v90 = vsel %vm86, 1, 0
    %v91 = vsel %vm87, 1, 0
    %v92 = vcvt.s32.f32 %v88
    %v93 = vcvt.s32.f32 %v89
    %v94 = vcvt.s32.f32 %v90
    %v95 = vcvt.s32.f32 %v91
    %v96 = vld [vmem:[#allocation2] sm:$0xff]
    %v97 = vld [vmem:[#allocation2 + $0x8] sm:$0xff]
    %98 = vmatpush.msra.mxu0 %v55
    %99 = vmatpush.msra.mxu0 %v54
    %100 = vmatpush.msra.mxu0 %v53
    %101 = vmatpush.msra.mxu0 %v52
    %102 = vmatpush.msra.mxu0 %v51
    %103 = vmatpush.msra.mxu0 %v50
    %104 = vmatpush.msra.mxu0 %v49
    %105 = vmatpush.msra.mxu0 %v48
    %106 = vmatpush.msra.mxu0 %v47
    %107 = vmatpush.msra.mxu0 %v46
    %108 = vmatpush.msra.mxu0 %v45
    %109 = vmatpush.msra.mxu0 %v44
    %110 = vmatpush.msra.mxu0 %v43
    %111 = vmatpush.msra.mxu0 %v42
    %112 = vmatpush.msra.mxu0 %v41
    %113 = vmatpush.msra.mxu0 %v40
    %114 = vmatmul.f32.gmra.mxu0 %v92
    %v115 = vpop.f32.mrf.mxu0
    %v116 = vadd.f32 0.0, %v115
    %117 = vmatmul.f32.gmra.mxu0 %v94
    %v118 = vpop.f32.mrf.mxu0
    %v119 = vadd.f32 0.0, %v118
    %120 = vdwg.mxu0
    %121 = vmatpush.msra.mxu0 %v71
    %122 = vmatpush.msra.mxu0 %v70
    %123 = vmatpush.msra.mxu0 %v69
    %124 = vmatpush.msra.mxu0 %v68
    %125 = vmatpush.msra.mxu0 %v67
    %126 = vmatpush.msra.mxu0 %v66
    %127 = vmatpush.msra.mxu0 %v65
    %128 = vmatpush.msra.mxu0 %v64
    %129 = vmatpush.msra.mxu0 %v63
    %130 = vmatpush.msra.mxu0 %v62
    %131 = vmatpush.msra.mxu0 %v61
    %132 = vmatpush.msra.mxu0 %v60
    %133 = vmatpush.msra.mxu0 %v59
    %134 = vmatpush.msra.mxu0 %v58
    %135 = vmatpush.msra.mxu0 %v57
    %136 = vmatpush.msra.mxu0 %v56
    %137 = vmatmul.f32.gmra.mxu0 %v93
    %v138 = vpop.f32.mrf.mxu0
    %v139 = vadd.f32 %v116, %v138
    %140 = vmatmul.f32.gmra.mxu0 %v95
    %v141 = vpop.f32.mrf.mxu0
    %v142 = vadd.f32 %v119, %v141
    %143 = vdwg.mxu0
    %v144 = vadd.f32 %v96, %v139
    %v145 = vadd.f32 %v97, %v142
    %146 = vst [vmem:[#allocation2] sm:$0xff] %v144
    %147 = vst [vmem:[#allocation2 + $0x8] sm:$0xff] %v145
    %v148 = vld [vmem:[#allocation2] sm:$0xff]
    %v149 = vld [vmem:[#allocation2 + $0x8] sm:$0xff]
    %150 = vst [vmem:[#allocation6] sm:$0xff] %v148
    %151 = vst [vmem:[#allocation6 + $0x8] sm:$0xff] %v149
    // Predicated region
    $region14: #{tpu_custom_call.1} parent=1 // pred_check
      _
    $region15: #{tpu_custom_call.1} parent=1 // pred_check_branch
      %153 = sbr.rel (0) target = $region17
    $region16: #{tpu_custom_call.1} parent=1 // pred_region
      %155 = vsyncadd [#allocation5], 0
      %s156 = sshll.u32 [#allocation6], 4
      %s157 = int_to_ptr.vmem [resolvable:$true] %s156
      %s158 = sshll.u32 %s2, 4
      %s159 = int_to_ptr.hbm [resolvable:$true] %s158
      %164 = dma.vmem_to_hbm [thread:$0]  %s157, 256, %s159, [#allocation5], 128, 128, 8
    $region17: #{tpu_custom_call.1} parent=1 // pred_fallthru
      _
    // Predicated region
    $region18: #{tpu_custom_call.1} parent=1 // pred_check
      _
    $region19: #{tpu_custom_call.1} parent=1 // pred_check_branch
      %166 = sbr.rel (0) target = $region21
    $region20: #{tpu_custom_call.1} parent=1 // pred_region
      %168 = dma.done [#allocation5], 256
    $region21: #{tpu_custom_call.1} parent=1 // pred_fallthru
      _
    %169 = vsyncpa [#allocation4], 1
    %170 = vsyncpa [#allocation5], 1

// kernel: tpu_custom_call.1
$region0: #{tpu_custom_call.1}
  #allocation0 [shape = 'u32[]', space=smem, size = 0x4, offset = 0x4, fixed_abs, tag = 'smem constant byte address 0x4 - core index']
  #allocation1 [shape = 'u32[72,128]{1,0:T(1,128)}', space=vmem, size = 0x9000, scoped, tag = 'internal scratch']
  #allocation2 [shape = 'f32[16,128]{1,0:T(8,128)}', space=vmem, size = 0x2000, scoped, tag = 'scratch operand']
  %s0 = inlined_call_operand.vmem [shape: s32[1,16,1], index: 0, kind: input, shape index: {}]
  %s1 = inlined_call_operand.hbm [shape: f32[256,128], index: 1, kind: input, shape index: {}]
  %s2 = inlined_call_operand.hbm [shape: f32[16,128], index: 2, kind: output, shape index: {}]
  %s3 = sld [smem:[#allocation0]]
  $region22: #{tpu_custom_call.1} parent=0
    _
  %s5 = ssub.s32 1, %s3
  %s6 = scalar_select 0, %s5, %s3
  $region1: #{tpu_custom_call.1} parent=0
    #allocation3 [shape = 'u8[131072]{0}', space=vmem, size = 0x20000, scoped, tag = 'input window, operand 1, single buffered']
    #allocation4 [shape = 's32[1]{0}', space=sflag, size = 0x4, scoped, tag = 'scoped memory for tpu_custom_call.1']
    #allocation5 [shape = 's32[1]{0}', space=sflag, size = 0x4, scoped, tag = 'scoped memory for tpu_custom_call.1']
    #allocation6 [shape = 'u8[8192]{0}', space=vmem, size = 0x2000, scoped, tag = 'output window, operand 0, single buffered']
    %7 = vsyncpa [#allocation4], 0
    %8 = vsyncpa [#allocation5], 0
    // Predicated region
    $region2: #{tpu_custom_call.1} parent=1 // pred_check
      _
    $region3: #{tpu_custom_call.1} parent=1 // pred_check_branch
      %10 = sbr.rel (0) target = $region5
    $region4: #{tpu_custom_call.1} parent=1 // pred_region
      _
    $region5: #{tpu_custom_call.1} parent=1 // pred_fallthru
      _
    // Predicated region
    $region6: #{tpu_custom_call.1} parent=1 // pred_check
      _
    $region7: #{tpu_custom_call.1} parent=1 // pred_check_branch
      %12 = sbr.rel (0) target = $region9
    $region8: #{tpu_custom_call.1} parent=1 // pred_region
      %14 = vsyncadd [#allocation4], 0
      %s15 = sshll.u32 %s1, 4
      %s16 = int_to_ptr.hbm [resolvable:$true] %s15
      %s17 = sshll.u32 [#allocation3], 4
      %s18 = int_to_ptr.vmem [resolvable:$true] %s17
      %23 = dma.hbm_to_vmem [thread:$0]  %s16, 4096, %s18, [#allocation4], 128, 128, 8
    $region9: #{tpu_custom_call.1} parent=1 // pred_fallthru
      _
    // Predicated region
    $region10: #{tpu_custom_call.1} parent=1 // pred_check
      _
    $region11: #{tpu_custom_call.1} parent=1 // pred_check_branch
      %25 = sbr.rel (0) target = $region13
    $region12: #{tpu_custom_call.1} parent=1 // pred_region
      %27 = dma.done [#allocation4], 4096
    $region13: #{tpu_custom_call.1} parent=1 // pred_fallthru
      _
    %v28 = vld [vmem:[%s0] sm:$0xff]
    %v29 = vld [vmem:[%s0 + $0x8] sm:$0xff]
    %vm30 = vcmp.gt.s32.totalorder %v28, 0
    %v31 = vsel %vm30, %v28, 0
    %vm32 = vcmp.gt.s32.totalorder %v29, 0
    %v33 = vsel %vm32, %v29, 0
    %vm34 = vcmp.lt.s32.totalorder %v31, 255
    %v35 = vsel %vm34, %v31, 255
    %vm36 = vcmp.lt.s32.totalorder %v33, 255
    %v37 = vsel %vm36, %v33, 255
    %38 = vst [vmem:[#allocation2] sm:$0xff] 0.0
    %39 = vst [vmem:[#allocation2 + $0x8] sm:$0xff] 0.0
    %v40 = vld [vmem:[#allocation3] sm:$0xff]
    %v41 = vld [vmem:[#allocation3 + $0x8] sm:$0xff]
    %v42 = vld [vmem:[#allocation3 + $0x10] sm:$0xff]
    %v43 = vld [vmem:[#allocation3 + $0x18] sm:$0xff]
    %v44 = vld [vmem:[#allocation3 + $0x20] sm:$0xff]
    %v45 = vld [vmem:[#allocation3 + $0x28] sm:$0xff]
    %v46 = vld [vmem:[#allocation3 + $0x30] sm:$0xff]
    %v47 = vld [vmem:[#allocation3 + $0x38] sm:$0xff]
    %v48 = vld [vmem:[#allocation3 + $0x40] sm:$0xff]
    %v49 = vld [vmem:[#allocation3 + $0x48] sm:$0xff]
    %v50 = vld [vmem:[#allocation3 + $0x50] sm:$0xff]
    %v51 = vld [vmem:[#allocation3 + $0x58] sm:$0xff]
    %v52 = vld [vmem:[#allocation3 + $0x60] sm:$0xff]
    %v53 = vld [vmem:[#allocation3 + $0x68] sm:$0xff]
    %v54 = vld [vmem:[#allocation3 + $0x70] sm:$0xff]
    %v55 = vld [vmem:[#allocation3 + $0x78] sm:$0xff]
    %v56 = vld [vmem:[#allocation3 + $0x80] sm:$0xff]
    %v57 = vld [vmem:[#allocation3 + $0x88] sm:$0xff]
    %v58 = vld [vmem:[#allocation3 + $0x90] sm:$0xff]
    %v59 = vld [vmem:[#allocation3 + $0x98] sm:$0xff]
    %v60 = vld [vmem:[#allocation3 + $0xa0] sm:$0xff]
    %v61 = vld [vmem:[#allocation3 + $0xa8] sm:$0xff]
    %v62 = vld [vmem:[#allocation3 + $0xb0] sm:$0xff]
    %v63 = vld [vmem:[#allocation3 + $0xb8] sm:$0xff]
    %v64 = vld [vmem:[#allocation3 + $0xc0] sm:$0xff]
    %v65 = vld [vmem:[#allocation3 + $0xc8] sm:$0xff]
    %v66 = vld [vmem:[#allocation3 + $0xd0] sm:$0xff]
    %v67 = vld [vmem:[#allocation3 + $0xd8] sm:$0xff]
    %v68 = vld [vmem:[#allocation3 + $0xe0] sm:$0xff]
    %v69 = vld [vmem:[#allocation3 + $0xe8] sm:$0xff]
    %v70 = vld [vmem:[#allocation3 + $0xf0] sm:$0xff]
    %v71 = vld [vmem:[#allocation3 + $0xf8] sm:$0xff]
    %v72 = vlaneseq
    %v73 = vand.u32 %v72, 127
    %v74 = vadd.s32 %v73, 128
    %v75 = vstv 0
    %v76 = vadd.s32 %v73, %v75
    %v77 = vadd.s32 %v74, %v75
    %78 = vset.pattern.permute.xlu0 0
    %79 = vperm.xlu0 %78, %v35
    %v80 = vpop.permute.xlu0 %79
    %81 = vset.pattern.permute.xlu0 0
    %82 = vperm.xlu0 %81, %v37
    %v83 = vpop.permute.xlu0 %82
    %vm84 = vcmp.eq.s32.totalorder %v76, %v80
    %vm85 = vcmp.eq.s32.totalorder %v77, %v80
    %vm86 = vcmp.eq.s32.totalorder %v76, %v83
    %vm87 = vcmp.eq.s32.totalorder %v77, %v83
    %v88 = vsel %vm84, 1, 0
    %v89 = vsel %vm85, 1, 0
    %v90 = vsel %vm86, 1, 0
    %v91 = vsel %vm87, 1, 0
    %v92 = vcvt.s32.f32 %v88
    %v93 = vcvt.s32.f32 %v89
    %v94 = vcvt.s32.f32 %v90
    %v95 = vcvt.s32.f32 %v91
    %v96 = vld [vmem:[#allocation2] sm:$0xff]
    %v97 = vld [vmem:[#allocation2 + $0x8] sm:$0xff]
    %98 = vmatpush.msra.mxu0 %v55
    %99 = vmatpush.msra.mxu0 %v54
    %100 = vmatpush.msra.mxu0 %v53
    %101 = vmatpush.msra.mxu0 %v52
    %102 = vmatpush.msra.mxu0 %v51
    %103 = vmatpush.msra.mxu0 %v50
    %104 = vmatpush.msra.mxu0 %v49
    %105 = vmatpush.msra.mxu0 %v48
    %106 = vmatpush.msra.mxu0 %v47
    %107 = vmatpush.msra.mxu0 %v46
    %108 = vmatpush.msra.mxu0 %v45
    %109 = vmatpush.msra.mxu0 %v44
    %110 = vmatpush.msra.mxu0 %v43
    %111 = vmatpush.msra.mxu0 %v42
    %112 = vmatpush.msra.mxu0 %v41
    %113 = vmatpush.msra.mxu0 %v40
    %114 = vmatmul.f32.gmra.mxu0 %v92
    %v115 = vpop.f32.mrf.mxu0
    %v116 = vadd.f32 0.0, %v115
    %117 = vmatmul.f32.gmra.mxu0 %v94
    %v118 = vpop.f32.mrf.mxu0
    %v119 = vadd.f32 0.0, %v118
    %120 = vdwg.mxu0
    %121 = vmatpush.msra.mxu0 %v71
    %122 = vmatpush.msra.mxu0 %v70
    %123 = vmatpush.msra.mxu0 %v69
    %124 = vmatpush.msra.mxu0 %v68
    %125 = vmatpush.msra.mxu0 %v67
    %126 = vmatpush.msra.mxu0 %v66
    %127 = vmatpush.msra.mxu0 %v65
    %128 = vmatpush.msra.mxu0 %v64
    %129 = vmatpush.msra.mxu0 %v63
    %130 = vmatpush.msra.mxu0 %v62
    %131 = vmatpush.msra.mxu0 %v61
    %132 = vmatpush.msra.mxu0 %v60
    %133 = vmatpush.msra.mxu0 %v59
    %134 = vmatpush.msra.mxu0 %v58
    %135 = vmatpush.msra.mxu0 %v57
    %136 = vmatpush.msra.mxu0 %v56
    %137 = vmatmul.f32.gmra.mxu0 %v93
    %v138 = vpop.f32.mrf.mxu0
    %v139 = vadd.f32 %v116, %v138
    %140 = vmatmul.f32.gmra.mxu0 %v95
    %v141 = vpop.f32.mrf.mxu0
    %v142 = vadd.f32 %v119, %v141
    %143 = vdwg.mxu0
    %v144 = vadd.f32 %v96, %v139
    %v145 = vadd.f32 %v97, %v142
    %146 = vst [vmem:[#allocation2] sm:$0xff] %v144
    %147 = vst [vmem:[#allocation2 + $0x8] sm:$0xff] %v145
    %v148 = vld [vmem:[#allocation2] sm:$0xff]
    %v149 = vld [vmem:[#allocation2 + $0x8] sm:$0xff]
    %150 = vst [vmem:[#allocation6] sm:$0xff] %v148
    %151 = vst [vmem:[#allocation6 + $0x8] sm:$0xff] %v149
    // Predicated region
    $region14: #{tpu_custom_call.1} parent=1 // pred_check
      _
    $region15: #{tpu_custom_call.1} parent=1 // pred_check_branch
      %153 = sbr.rel (0) target = $region17
    $region16: #{tpu_custom_call.1} parent=1 // pred_region
      %155 = vsyncadd [#allocation5], 0
      %s156 = sshll.u32 [#allocation6], 4
      %s157 = int_to_ptr.vmem [resolvable:$true] %s156
      %s158 = sshll.u32 %s2, 4
      %s159 = int_to_ptr.hbm [resolvable:$true] %s158
      %164 = dma.vmem_to_hbm [thread:$0]  %s157, 256, %s159, [#allocation5], 128, 128, 8
    $region17: #{tpu_custom_call.1} parent=1 // pred_fallthru
      _
    // Predicated region
    $region18: #{tpu_custom_call.1} parent=1 // pred_check
      _
    $region19: #{tpu_custom_call.1} parent=1 // pred_check_branch
      %166 = sbr.rel (0) target = $region21
    $region20: #{tpu_custom_call.1} parent=1 // pred_region
      %168 = dma.done [#allocation5], 256
    $region21: #{tpu_custom_call.1} parent=1 // pred_fallthru
      _
    %169 = vsyncpa [#allocation4], 1
    %170 = vsyncpa [#allocation5], 1

</llo_original>
